<compile_context>
chip_gen: v7x
topology: tpu7x:2x2x1
jax: 0.10.0
libtpu: 0.0.40
codegen_flags: <defaults>
</compile_context>

<pallas_src>
import functools

import jax
import jax.numpy as jnp
from jax import lax
from jax.experimental import pallas as pl
from jax.experimental.pallas import tpu as pltpu


def _ntxent_poly_kernel(row_ref, col_ref, par_ref, ce_ref, pt_ref,
                        m_sc, l_sc, *, tile_rows, tile_cols, inv_temperature):
    """One (row-tile, col-tile) block of the (2B, 2B) logits matrix.

    Grid = (num_row_tiles, num_col_tiles).  The column axis is the online-LSE
    reduction axis (innermost, "arbitrary"); the row axis is independent
    ("parallel" -> shardable across v7x's two TensorCores).  Each row tile
    emits its partial CE / pt sums into lane-dense per-tile output blocks.
    """
    i = pl.program_id(0)
    j = pl.program_id(1)
    last_j = pl.num_programs(1) - 1
    neg_inf = jnp.float32(-1e30)
    inv_t = jnp.float32(inv_temperature)

    @pl.when(j == 0)
    def _init_row_state():
        m_sc[...] = jnp.full_like(m_sc, neg_inf)
        l_sc[...] = jnp.zeros_like(l_sc)

    # Embeddings arrive already normalized (cosine path) / cast (dot path)
    # from the wrapper — no per-block normalization work in the kernel.
    row = row_ref[...]                                  # (TR, D)
    col = col_ref[...]                                  # (TC, D)

    # (TR, TC) block of the scaled similarity matrix; contraction on the last
    # dim of both operands -> no transpose materialized, MXU accumulates f32.
    s = lax.dot_general(
        row, col,
        dimension_numbers=(((1,), (1,)), ((), ())),
        preferred_element_type=jnp.float32) * inv_t

    # Only blocks that actually intersect the global diagonal pay for the
    # iota/compare/select self-similarity mask; all other blocks take the
    # cheap unmasked path.  Masking the diagonal makes the row-wise LSE run
    # over all j != r, which equals the LSE over the torch logits row
    # [positive, negatives] because {pos} U negatives = {sim[r, j] : j != r}.
    row0 = i * tile_rows
    col0 = j * tile_cols
    intersects_diag = (row0 < col0 + tile_cols) & (col0 < row0 + tile_rows)

    def _online_update(sv):
        m_prev = m_sc[...]
        m_new = jnp.maximum(m_prev, jnp.max(sv, axis=-1, keepdims=True))
        l_sc[...] = l_sc[...] * jnp.exp(m_prev - m_new) + jnp.sum(
            jnp.exp(sv - m_new), axis=-1, keepdims=True)
        m_sc[...] = m_new

    @pl.when(intersects_diag)
    def _update_masked():
        g_row = row0 + lax.broadcasted_iota(
            jnp.int32, (tile_rows, tile_cols), 0)
        g_col = col0 + lax.broadcasted_iota(
            jnp.int32, (tile_rows, tile_cols), 1)
        _online_update(jnp.where(g_row == g_col, neg_inf, s))

    @pl.when(jnp.logical_not(intersects_diag))
    def _update_unmasked():
        _online_update(s)

    @pl.when(j == last_j)
    def _emit_row_tile_partials():
        lse = m_sc[...] + jnp.log(l_sc[...])                        # (TR, 1)
        # Positive logit: row-wise dot with the partner embedding — O(TR*D)
        # VPU work instead of an (N, N) partner mask + modulo + masked sum.
        pos = jnp.sum(row.astype(jnp.float32) * par_ref[...].astype(jnp.float32),
                      axis=-1, keepdims=True) * inv_t               # (TR, 1)
        # CrossEntropyLoss(reduction='sum') partial, target class 0.
        ce_val = jnp.sum(lse - pos)
        # pt numerator partial: sum_r softmax(logits_r)[0] = sum_r exp(pos-lse).
        pt_val = jnp.sum(jnp.exp(pos - lse))
        # Lane-dense (1, 8, 128) per-row-tile output blocks (unmasked stores).
        ce_ref[...] = jnp.broadcast_to(ce_val, ce_ref.shape)
        pt_ref[...] = jnp.broadcast_to(pt_val, pt_ref.shape)


def _pick_tile(extent, preferred, granules=(256, 128, 8)):
    """Largest tile <= preferred that is a multiple of the coarsest possible
    granule and divides `extent`; falls back to the full extent."""
    for g in granules:
        if extent % g == 0:
            t = min(preferred, extent)
            t -= t % g
            t = max(t, g)
            while extent % t:
                t -= g
            return t
    return extent                      # full extent is always a legal block


def ntxent_loss_poly(zis, zjs, *, temperature=0.2, use_cosine_similarity=True,
                     tile_rows=None, tile_cols=None, use_bf16_matmul=False,
                     vmem_budget_bytes=40 * 1024 * 1024):
    """Pallas TPU NT-Xent (poly) loss.  zis, zjs: (B, D) float arrays."""
    assert zis.shape == zjs.shape and zis.ndim == 2
    B, D = zis.shape
    N = 2 * B

    compute_dtype = jnp.bfloat16 if use_bf16_matmul else jnp.float32
    itemsize = jnp.dtype(compute_dtype).itemsize

    # representations = cat([zjs, zis], dim=0) — cheap XLA-level copy.
    rep = jnp.concatenate([zjs, zis], axis=0).astype(jnp.float32)    # (2B, D)
    if use_cosine_similarity:
        # Hoisted normalization: done ONCE here instead of per kernel block.
        inv_norm = lax.rsqrt(jnp.maximum(
            jnp.sum(rep * rep, axis=-1, keepdims=True), jnp.float32(1e-8)))
        rep = rep * inv_norm
    rep = rep.astype(compute_dtype)

    # ---- tile selection: lane-aligned cols, VMEM-budget-sized rows ----
    if tile_cols is None:
        tile_cols = _pick_tile(N, 512)
    if tile_rows is None:
        # Streams: 2*(2*TR + TC)*D*itemsize (row+partner+col, double-buffered)
        # Intermediates: ~4*TR*TC*4 (f32 s block + exp temporaries)
        bytes_per_row = D * itemsize
        denom = max(4 * bytes_per_row + 16 * tile_cols, 1)
        max_tr = (vmem_budget_bytes - 2 * tile_cols * bytes_per_row) // denom
        max_tr = int(max(8, min(1024, max_tr)))
        tile_rows = _pick_tile(N, max_tr, granules=(8,))
    assert N % tile_rows == 0 and N % tile_cols == 0, (N, tile_rows, tile_cols)
    n_row_tiles = N // tile_rows
    n_col_tiles = N // tile_cols

    # Partner of representation row r is representation row (r + B) mod 2B.
    # When tile_rows divides B, alias the partner stream straight onto `rep`
    # via its index_map (no extra (2B, D) HBM copy); otherwise use one rolled
    # copy (still a single extra HBM array, no second concat of raw inputs).
    if B % tile_rows == 0:
        shift = B // tile_rows
        partner_arr = rep
        partner_map = lambda i, j, s=shift, n=n_row_tiles: ((i + s) % n, 0)
    else:
        partner_arr = jnp.roll(rep, -B, axis=0)
        partner_map = lambda i, j: (i, 0)

    kernel = functools.partial(
        _ntxent_poly_kernel,
        tile_rows=tile_rows,
        tile_cols=tile_cols,
        inv_temperature=1.0 / float(temperature),
    )

    cost = pl.CostEstimate(
        flops=2 * N * N * D + 8 * N * N + 4 * N * D,
        transcendentals=N * N + 4 * N,
        bytes_accessed=(n_row_tiles + 2) * N * D * itemsize
        + 2 * n_row_tiles * 8 * 128 * 4,
    )

    vmem_est = (2 * (2 * tile_rows + tile_cols) * D * itemsize
                + 4 * tile_rows * tile_cols * 4 + (4 << 20))
    vmem_limit = int(min(64 * 1024 * 1024, max(32 * 1024 * 1024, vmem_est)))

    part_shape = (n_row_tiles, 8, 128)        # lane-dense per-row-tile partials
    ce_part, pt_part = pl.pallas_call(
        kernel,
        out_shape=(jax.ShapeDtypeStruct(part_shape, jnp.float32),
                   jax.ShapeDtypeStruct(part_shape, jnp.float32)),
        grid_spec=pltpu.PrefetchScalarGridSpec(
            num_scalar_prefetch=0,
            grid=(n_row_tiles, n_col_tiles),
            in_specs=[
                pl.BlockSpec((tile_rows, D), lambda i, j: (i, 0)),   # row tile
                pl.BlockSpec((tile_cols, D), lambda i, j: (j, 0)),   # col tile
                pl.BlockSpec((tile_rows, D), partner_map),           # partner
            ],
            out_specs=[
                pl.BlockSpec((1, 8, 128), lambda i, j: (i, 0, 0)),   # CE partial
                pl.BlockSpec((1, 8, 128), lambda i, j: (i, 0, 0)),   # pt partial
            ],
            scratch_shapes=[
                pltpu.VMEM((tile_rows, 1), jnp.float32),   # m (online max)
                pltpu.VMEM((tile_rows, 1), jnp.float32),   # l (online sum)
            ],
        ),
        # Row tiles are independent (their CE/pt partials go to distinct output
        # blocks) -> "parallel" row axis (v7x megacore); column axis reduces
        # into the per-row-tile m/l scratch -> "arbitrary".
        compiler_params=pltpu.CompilerParams(
            dimension_semantics=("parallel", "arbitrary"),
            vmem_limit_bytes=vmem_limit),
        cost_estimate=cost,
    )(rep, rep, partner_arr)

    # Tiny final reduction + loss formula in XLA.
    ce = jnp.sum(ce_part[:, 0, 0])
    pt = jnp.sum(pt_part[:, 0, 0]) / jnp.float32(N * (N - 1))
    return ce / jnp.float32(N) + jnp.float32(B) * (jnp.float32(1.0 / B) - pt)


def _reference_ntxent_poly(zis, zjs, temperature, use_cosine_similarity):
    """Pure-JAX reference mirroring the PyTorch forward exactly."""
    import numpy as np
    B = zis.shape[0]
    N = 2 * B
    rep = jnp.concatenate([zjs, zis], axis=0)
    dots = jnp.matmul(rep, rep.T, precision=jax.lax.Precision.HIGHEST)
    if use_cosine_similarity:
        nrm = jnp.linalg.norm(rep, axis=-1, keepdims=True)
        sim = dots / jnp.maximum(nrm * nrm.T, 1e-8)
    else:
        sim = dots
    l_pos = jnp.diag(sim, k=B)
    r_pos = jnp.diag(sim, k=-B)
    positives = jnp.concatenate([l_pos, r_pos]).reshape(N, 1)
    mask = (1 - (np.eye(N) + np.eye(N, k=-B) + np.eye(N, k=B))).astype(bool)
    negatives = sim[mask].reshape(N, -1)
    logits = jnp.concatenate([positives, negatives], axis=1) / temperature
    lse = jax.nn.logsumexp(logits, axis=-1)
    ce = jnp.sum(lse - logits[:, 0])
    pt = jnp.mean(
        jnp.concatenate(
            [jnp.ones((N, 1)), jnp.zeros((N, negatives.shape[-1]))], axis=-1)
        * jax.nn.softmax(logits, axis=-1))
    return ce / N + B * (1.0 / B - pt)


if __name__ == "__main__":
    key = jax.random.PRNGKey(0)
    k1, k2 = jax.random.split(key)
    B, D = 8, 32          # N = 2B = 16 rows in the similarity matrix
    temperature = 0.2
    zis = jax.random.normal(k1, (B, D), dtype=jnp.float32)
    zjs = jax.random.normal(k2, (B, D), dtype=jnp.float32)

    # 1) Tiled path: 8x8 tiles -> grid (2, 2). Exercises the online LSE, the
    #    diagonal-skip branch on off-diagonal blocks and the partner-aliasing
    #    index_map (tile_rows divides B).
    loss_tiled = ntxent_loss_poly(zis, zjs, temperature=temperature,
                                  use_cosine_similarity=True,
                                  tile_rows=8, tile_cols=8)
    jax.block_until_ready(loss_tiled)

    # 2) Default tiling (single 16x16 block here; rolled-partner fallback).
    loss_default = ntxent_loss_poly(zis, zjs, temperature=temperature,
                                    use_cosine_similarity=True)
    jax.block_until_ready(loss_default)

    ref = _reference_ntxent_poly(zis, zjs, temperature, True)
    assert jnp.allclose(loss_tiled, ref, rtol=1e-4, atol=1e-4), (loss_tiled, ref)
    assert jnp.allclose(loss_default, ref, rtol=1e-4, atol=1e-4), (loss_default, ref)

    # 3) Dot-similarity branch (looser tolerance: larger logit magnitudes).
    loss_dot = ntxent_loss_poly(zis, zjs, temperature=temperature,
                                use_cosine_similarity=False,
                                tile_rows=8, tile_cols=8)
    jax.block_until_ready(loss_dot)
    ref_dot = _reference_ntxent_poly(zis, zjs, temperature, False)
    assert jnp.isfinite(loss_dot)
    assert jnp.allclose(loss_dot, ref_dot, rtol=1e-3, atol=1e-3), (loss_dot, ref_dot)

    # 4) Opt-in bf16 MXU path (changes numerics slightly; loose tolerance).
    loss_bf16 = ntxent_loss_poly(zis, zjs, temperature=temperature,
                                 use_cosine_similarity=True,
                                 tile_rows=8, tile_cols=8,
                                 use_bf16_matmul=True)
    jax.block_until_ready(loss_bf16)
    assert jnp.isfinite(loss_bf16)
    assert jnp.allclose(loss_bf16, ref, rtol=5e-2, atol=5e-2), (loss_bf16, ref)

    print("KERNEL_OK")
</pallas_src>

<mosaic_0001>
module attributes {stable_mosaic.version = 11 : i64} {
  func.func @_ntxent_poly_kernel(%arg0: i32, %arg1: i32, %arg2: memref<8x32xf32, #tpu.memory_space<vmem>>, %arg3: memref<8x32xf32, #tpu.memory_space<vmem>>, %arg4: memref<8x32xf32, #tpu.memory_space<vmem>>, %arg5: memref<1x8x128xf32, #tpu.memory_space<vmem>>, %arg6: memref<1x8x128xf32, #tpu.memory_space<vmem>>, %arg7: memref<8x1xf32, #tpu.memory_space<vmem>>, %arg8: memref<8x1xf32, #tpu.memory_space<vmem>>) attributes {dimension_semantics = [#tpu.dimension_semantics<parallel>, #tpu.dimension_semantics<arbitrary>], iteration_bounds = array<i64: 2, 2>, scalar_prefetch = 0 : i64, scratch_operands = 2 : i64, tpu.core_type = #tpu.core_type<tc>, window_params = [{transform_indices = @transform_0, window_bounds = array<i64: 8, 32>}, {transform_indices = @transform_1, window_bounds = array<i64: 8, 32>}, {transform_indices = @transform_2, window_bounds = array<i64: 8, 32>}, {transform_indices = @transform_3, window_bounds = array<i64: 1, 8, 128>}, {transform_indices = @transform_4, window_bounds = array<i64: 1, 8, 128>}]} {
    %c0_i32 = arith.constant 0 : i32
    %0 = arith.cmpi eq, %arg1, %c0_i32 : i32
    %1 = arith.extui %0 : i1 to i32
    %cst = arith.constant -1.000000e+30 : f32
    %c0_i32_0 = arith.constant 0 : i32
    %2 = arith.cmpi ne, %1, %c0_i32_0 : i32
    scf.if %2 {
      %23 = vector.broadcast %cst : f32 to vector<8x1xf32>
      %c0_14 = arith.constant 0 : index
      %c0_15 = arith.constant 0 : index
      %24 = vector.load %arg7[%c0_14, %c0_15] : memref<8x1xf32, #tpu.memory_space<vmem>>, vector<8x1xf32>
      tpu.vector_store %arg7[%c0_14, %c0_15], %23 {strides = array<i32>} : memref<8x1xf32, #tpu.memory_space<vmem>>, vector<8x1xf32>,
      %cst_16 = arith.constant 0.000000e+00 : f32
      %25 = vector.broadcast %cst_16 : f32 to vector<8x1xf32>
      %c0_17 = arith.constant 0 : index
      %c0_18 = arith.constant 0 : index
      %26 = vector.load %arg8[%c0_17, %c0_18] : memref<8x1xf32, #tpu.memory_space<vmem>>, vector<8x1xf32>
      tpu.vector_store %arg8[%c0_17, %c0_18], %25 {strides = array<i32>} : memref<8x1xf32, #tpu.memory_space<vmem>>, vector<8x1xf32>,
    } else {
    }
    %c0 = arith.constant 0 : index
    %c0_1 = arith.constant 0 : index
    %3 = vector.load %arg2[%c0, %c0_1] : memref<8x32xf32, #tpu.memory_space<vmem>>, vector<8x32xf32>
    %c0_2 = arith.constant 0 : index
    %c0_3 = arith.constant 0 : index
    %4 = vector.load %arg3[%c0_2, %c0_3] : memref<8x32xf32, #tpu.memory_space<vmem>>, vector<8x32xf32>
    %cst_4 = arith.constant dense<0.000000e+00> : vector<8x8xf32>
    %5 = tpu.matmul %3, %4, %cst_4 {dimension_numbers = #tpu.dot_dimension_numbers<[1], [1], [0], [0], [0, 0, 1, 0], [], []>} : vector<8x32xf32>, vector<8x32xf32>, vector<8x8xf32> -> vector<8x8xf32>
    %cst_5 = arith.constant 5.000000e+00 : f32
    %6 = vector.broadcast %cst_5 : f32 to vector<8x8xf32>
    %7 = arith.mulf %5, %6 : vector<8x8xf32>
    %c8_i32 = arith.constant 8 : i32
    %8 = arith.muli %arg0, %c8_i32 : i32
    %c8_i32_6 = arith.constant 8 : i32
    %9 = arith.muli %arg1, %c8_i32_6 : i32
    %c8_i32_7 = arith.constant 8 : i32
    %10 = arith.addi %9, %c8_i32_7 : i32
    %11 = arith.cmpi slt, %8, %10 : i32
    %c8_i32_8 = arith.constant 8 : i32
    %12 = arith.addi %8, %c8_i32_8 : i32
    %13 = arith.cmpi slt, %9, %12 : i32
    %14 = arith.andi %11, %13 : i1
    %15 = arith.extui %14 : i1 to i32
    %cst_9 = arith.constant -1.000000e+30 : f32
    %c0_i32_10 = arith.constant 0 : i32
    %16 = arith.cmpi ne, %15, %c0_i32_10 : i32
    scf.if %16 {
      %23 = tpu.iota {dimensions = array<i32: 0>} : vector<8x8xi32>
      %24 = vector.broadcast %8 : i32 to vector<8x8xi32>
      %25 = arith.addi %24, %23 : vector<8x8xi32>
      %26 = tpu.iota {dimensions = array<i32: 1>} : vector<8x8xi32>
      %27 = vector.broadcast %9 : i32 to vector<8x8xi32>
      %28 = arith.addi %27, %26 : vector<8x8xi32>
      %29 = arith.cmpi eq, %25, %28 : vector<8x8xi32>
      %30 = vector.broadcast %cst_9 : f32 to vector<8x8xf32>
      %31 = arith.select %29, %30, %7 : vector<8x8xi1>, vector<8x8xf32>
      %c0_14 = arith.constant 0 : index
      %c0_15 = arith.constant 0 : index
      %32 = vector.load %arg7[%c0_14, %c0_15] : memref<8x1xf32, #tpu.memory_space<vmem>>, vector<8x1xf32>
      %cst_16 = arith.constant dense<0xFF800000> : vector<8xf32>
      %33 = vector.multi_reduction <maximumf>, %31, %cst_16 [1] : vector<8x8xf32> to vector<8xf32>
      %34 = vector.shape_cast %33 : vector<8xf32> to vector<8x1xf32>
      %35 = arith.maximumf %32, %34 : vector<8x1xf32>
      %c0_17 = arith.constant 0 : index
      %c0_18 = arith.constant 0 : index
      %36 = vector.load %arg8[%c0_17, %c0_18] : memref<8x1xf32, #tpu.memory_space<vmem>>, vector<8x1xf32>
      %37 = arith.subf %32, %35 : vector<8x1xf32>
      %38 = math.exp %37 : vector<8x1xf32>
      %39 = arith.mulf %36, %38 : vector<8x1xf32>
      %40 = vector.broadcast %35 : vector<8x1xf32> to vector<8x8xf32>
      %41 = arith.subf %31, %40 : vector<8x8xf32>
      %42 = math.exp %41 : vector<8x8xf32>
      %cst_19 = arith.constant dense<0.000000e+00> : vector<8xf32>
      %43 = vector.multi_reduction <add>, %42, %cst_19 [1] : vector<8x8xf32> to vector<8xf32>
      %44 = vector.shape_cast %43 : vector<8xf32> to vector<8x1xf32>
      %45 = arith.addf %39, %44 : vector<8x1xf32>
      %c0_20 = arith.constant 0 : index
      %c0_21 = arith.constant 0 : index
      %46 = vector.load %arg8[%c0_20, %c0_21] : memref<8x1xf32, #tpu.memory_space<vmem>>, vector<8x1xf32>
      tpu.vector_store %arg8[%c0_20, %c0_21], %45 {strides = array<i32>} : memref<8x1xf32, #tpu.memory_space<vmem>>, vector<8x1xf32>,
      %c0_22 = arith.constant 0 : index
      %c0_23 = arith.constant 0 : index
      %47 = vector.load %arg7[%c0_22, %c0_23] : memref<8x1xf32, #tpu.memory_space<vmem>>, vector<8x1xf32>
      tpu.vector_store %arg7[%c0_22, %c0_23], %35 {strides = array<i32>} : memref<8x1xf32, #tpu.memory_space<vmem>>, vector<8x1xf32>,
    } else {
    }
    %true = arith.constant true
    %17 = arith.xori %14, %true : i1
    %18 = arith.extui %17 : i1 to i32
    %c0_i32_11 = arith.constant 0 : i32
    %19 = arith.cmpi ne, %18, %c0_i32_11 : i32
    scf.if %19 {
      %c0_14 = arith.constant 0 : index
      %c0_15 = arith.constant 0 : index
      %23 = vector.load %arg7[%c0_14, %c0_15] : memref<8x1xf32, #tpu.memory_space<vmem>>, vector<8x1xf32>
      %cst_16 = arith.constant dense<0xFF800000> : vector<8xf32>
      %24 = vector.multi_reduction <maximumf>, %7, %cst_16 [1] : vector<8x8xf32> to vector<8xf32>
      %25 = vector.shape_cast %24 : vector<8xf32> to vector<8x1xf32>
      %26 = arith.maximumf %23, %25 : vector<8x1xf32>
      %c0_17 = arith.constant 0 : index
      %c0_18 = arith.constant 0 : index
      %27 = vector.load %arg8[%c0_17, %c0_18] : memref<8x1xf32, #tpu.memory_space<vmem>>, vector<8x1xf32>
      %28 = arith.subf %23, %26 : vector<8x1xf32>
      %29 = math.exp %28 : vector<8x1xf32>
      %30 = arith.mulf %27, %29 : vector<8x1xf32>
      %31 = vector.broadcast %26 : vector<8x1xf32> to vector<8x8xf32>
      %32 = arith.subf %7, %31 : vector<8x8xf32>
      %33 = math.exp %32 : vector<8x8xf32>
      %cst_19 = arith.constant dense<0.000000e+00> : vector<8xf32>
      %34 = vector.multi_reduction <add>, %33, %cst_19 [1] : vector<8x8xf32> to vector<8xf32>
      %35 = vector.shape_cast %34 : vector<8xf32> to vector<8x1xf32>
      %36 = arith.addf %30, %35 : vector<8x1xf32>
      %c0_20 = arith.constant 0 : index
      %c0_21 = arith.constant 0 : index
      %37 = vector.load %arg8[%c0_20, %c0_21] : memref<8x1xf32, #tpu.memory_space<vmem>>, vector<8x1xf32>
      tpu.vector_store %arg8[%c0_20, %c0_21], %36 {strides = array<i32>} : memref<8x1xf32, #tpu.memory_space<vmem>>, vector<8x1xf32>,
      %c0_22 = arith.constant 0 : index
      %c0_23 = arith.constant 0 : index
      %38 = vector.load %arg7[%c0_22, %c0_23] : memref<8x1xf32, #tpu.memory_space<vmem>>, vector<8x1xf32>
      tpu.vector_store %arg7[%c0_22, %c0_23], %26 {strides = array<i32>} : memref<8x1xf32, #tpu.memory_space<vmem>>, vector<8x1xf32>,
    } else {
    }
    %c1_i32 = arith.constant 1 : i32
    %20 = arith.cmpi eq, %arg1, %c1_i32 : i32
    %21 = arith.extui %20 : i1 to i32
    %cst_12 = arith.constant 5.000000e+00 : f32
    %c0_i32_13 = arith.constant 0 : i32
    %22 = arith.cmpi ne, %21, %c0_i32_13 : i32
    scf.if %22 {
      %c0_14 = arith.constant 0 : index
      %c0_15 = arith.constant 0 : index
      %23 = vector.load %arg7[%c0_14, %c0_15] : memref<8x1xf32, #tpu.memory_space<vmem>>, vector<8x1xf32>
      %c0_16 = arith.constant 0 : index
      %c0_17 = arith.constant 0 : index
      %24 = vector.load %arg8[%c0_16, %c0_17] : memref<8x1xf32, #tpu.memory_space<vmem>>, vector<8x1xf32>
      %25 = math.log %24 : vector<8x1xf32>
      %26 = arith.addf %23, %25 : vector<8x1xf32>
      %c0_18 = arith.constant 0 : index
      %c0_19 = arith.constant 0 : index
      %27 = vector.load %arg4[%c0_18, %c0_19] : memref<8x32xf32, #tpu.memory_space<vmem>>, vector<8x32xf32>
      %28 = arith.mulf %3, %27 : vector<8x32xf32>
      %cst_20 = arith.constant dense<0.000000e+00> : vector<8xf32>
      %29 = vector.multi_reduction <add>, %28, %cst_20 [1] : vector<8x32xf32> to vector<8xf32>
      %30 = vector.shape_cast %29 : vector<8xf32> to vector<8x1xf32>
      %31 = vector.broadcast %cst_12 : f32 to vector<8x1xf32>
      %32 = arith.mulf %30, %31 : vector<8x1xf32>
      %33 = arith.subf %26, %32 : vector<8x1xf32>
      %34 = vector.shape_cast %33 : vector<8x1xf32> to vector<1x8x1xf32>
      %cst_21 = arith.constant dense<0.000000e+00> : vector<1xf32>
      %35 = vector.multi_reduction <add>, %34, %cst_21 [1, 2] : vector<1x8x1xf32> to vector<1xf32>
      %36 = vector.shape_cast %35 : vector<1xf32> to vector<1x1x1xf32>
      %37 = vector.extract %36[0, 0, 0] : f32 from vector<1x1x1xf32>
      %38 = arith.subf %32, %26 : vector<8x1xf32>
      %39 = math.exp %38 : vector<8x1xf32>
      %40 = vector.shape_cast %39 : vector<8x1xf32> to vector<1x8x1xf32>
      %cst_22 = arith.constant dense<0.000000e+00> : vector<1xf32>
      %41 = vector.multi_reduction <add>, %40, %cst_22 [1, 2] : vector<1x8x1xf32> to vector<1xf32>
      %42 = vector.shape_cast %41 : vector<1xf32> to vector<1x1x1xf32>
      %43 = vector.extract %42[0, 0, 0] : f32 from vector<1x1x1xf32>
      %44 = vector.broadcast %37 : f32 to vector<1x8x128xf32>
      %c0_23 = arith.constant 0 : index
      %c0_24 = arith.constant 0 : index
      %c0_25 = arith.constant 0 : index
      %45 = vector.load %arg5[%c0_23, %c0_24, %c0_25] : memref<1x8x128xf32, #tpu.memory_space<vmem>>, vector<1x8x128xf32>
      tpu.vector_store %arg5[%c0_23, %c0_24, %c0_25], %44 {strides = array<i32>} : memref<1x8x128xf32, #tpu.memory_space<vmem>>, vector<1x8x128xf32>,
      %46 = vector.broadcast %43 : f32 to vector<1x8x128xf32>
      %c0_26 = arith.constant 0 : index
      %c0_27 = arith.constant 0 : index
      %c0_28 = arith.constant 0 : index
      %47 = vector.load %arg6[%c0_26, %c0_27, %c0_28] : memref<1x8x128xf32, #tpu.memory_space<vmem>>, vector<1x8x128xf32>
      tpu.vector_store %arg6[%c0_26, %c0_27, %c0_28], %46 {strides = array<i32>} : memref<1x8x128xf32, #tpu.memory_space<vmem>>, vector<1x8x128xf32>,
    } else {
    }
    return
  }
  func.func @transform_0(%arg0: i32, %arg1: i32) -> (i32, i32) {
    %c0_i32 = arith.constant 0 : i32
    %c0_i32_0 = arith.constant 0 : i32
    return %arg0, %c0_i32 : i32, i32
  }
  func.func @transform_1(%arg0: i32, %arg1: i32) -> (i32, i32) {
    %c0_i32 = arith.constant 0 : i32
    %c0_i32_0 = arith.constant 0 : i32
    return %arg1, %c0_i32 : i32, i32
  }
  func.func @transform_2(%arg0: i32, %arg1: i32) -> (i32, i32) {
    %c1_i32 = arith.constant 1 : i32
    %0 = arith.addi %arg0, %c1_i32 : i32
    %c2_i32 = arith.constant 2 : i32
    %c0_i32 = arith.constant 0 : i32
    %1 = arith.cmpi eq, %c2_i32, %c0_i32 : i32
    %c1_i32_0 = arith.constant 1 : i32
    %2 = arith.select %1, %c1_i32_0, %c2_i32 : i32
    %3 = arith.remsi %0, %2 : i32
    %c0_i32_1 = arith.constant 0 : i32
    %4 = arith.cmpi ne, %3, %c0_i32_1 : i32
    %c0_i32_2 = arith.constant 0 : i32
    %5 = arith.cmpi slt, %3, %c0_i32_2 : i32
    %c0_i32_3 = arith.constant 0 : i32
    %6 = arith.cmpi slt, %2, %c0_i32_3 : i32
    %7 = arith.xori %5, %6 : i1
    %8 = arith.andi %7, %4 : i1
    %9 = arith.addi %3, %2 : i32
    %10 = arith.select %8, %9, %3 : i32
    %c0_i32_4 = arith.constant 0 : i32
    %c0_i32_5 = arith.constant 0 : i32
    return %10, %c0_i32_4 : i32, i32
  }
  func.func @transform_3(%arg0: i32, %arg1: i32) -> (i32, i32, i32) {
    %c0_i32 = arith.constant 0 : i32
    %c0_i32_0 = arith.constant 0 : i32
    %c0_i32_1 = arith.constant 0 : i32
    return %arg0, %c0_i32, %c0_i32_0 : i32, i32, i32
  }
  func.func @transform_4(%arg0: i32, %arg1: i32) -> (i32, i32, i32) {
    %c0_i32 = arith.constant 0 : i32
    %c0_i32_0 = arith.constant 0 : i32
    %c0_i32_1 = arith.constant 0 : i32
    return %arg0, %c0_i32, %c0_i32_0 : i32, i32, i32
  }
}

</mosaic_0001>

<llo_original>
// kernel: tpu_custom_call.1
$region0: #{tpu_custom_call.1}
  #allocation0 [shape = 'u32[]', space=smem, size = 0x4, offset = 0x4, fixed_abs, tag = 'smem constant byte address 0x4 - core index']
  #allocation1 [shape = 'u32[144,128]{1,0:T(1,128)}', space=vmem, size = 0x12000, scoped, tag = 'internal scratch']
  #allocation2 [shape = 'f32[8,1]{1,0:T(8,128)}', space=vmem, size = 0x1000, scoped, tag = 'scratch operand']
  #allocation3 [shape = 'f32[8,1]{1,0:T(8,128)}', space=vmem, size = 0x1000, scoped, tag = 'scratch operand']
  %s0 = inlined_call_operand.hbm [shape: f32[16,32], index: 0, kind: input, shape index: {}]
  %s1 = inlined_call_operand.hbm [shape: f32[16,32], index: 1, kind: input, shape index: {}]
  %s2 = inlined_call_operand.hbm [shape: f32[16,32], index: 2, kind: input, shape index: {}]
  %s3 = inlined_call_operand.hbm [shape: f32[2,8,128], index: 3, kind: output, shape index: {0}]
  %s4 = inlined_call_operand.hbm [shape: f32[2,8,128], index: 4, kind: output, shape index: {1}]
  %5 = xla_tuple %s3, %s4
  %s6 = sld [smem:[#allocation0]]
  $region81: #{tpu_custom_call.1} parent=0
    _
  %s8 = ssub.s32 1, %s6
  %s9 = scalar_select 0, %s8, %s6
  $region1: #{tpu_custom_call.1} parent=0
    #allocation4 [shape = 'u8[8192]{0}', space=vmem, size = 0x2000, scoped, tag = 'input window, operand 0']
    #allocation5 [shape = 's32[2]{0}', space=sflag, size = 0x8, scoped, tag = 'scoped memory for tpu_custom_call.1']
    #allocation6 [shape = 's32[2]{0}', space=sflag, size = 0x8, scoped, tag = 'scoped memory for tpu_custom_call.1']
    #allocation7 [shape = 'u8[8192]{0}', space=vmem, size = 0x2000, scoped, tag = 'input window, operand 1']
    #allocation8 [shape = 's32[2]{0}', space=sflag, size = 0x8, scoped, tag = 'scoped memory for tpu_custom_call.1']
    #allocation9 [shape = 'u8[8192]{0}', space=vmem, size = 0x2000, scoped, tag = 'input window, operand 2']
    #allocation10 [shape = 'u8[8192]{0}', space=vmem, size = 0x2000, scoped, tag = 'output window, operand 0']
    #allocation11 [shape = 'u8[8192]{0}', space=vmem, size = 0x2000, scoped, tag = 'output window, operand 1']
    #allocation12 [shape = 's32[2]{0}', space=sflag, size = 0x8, scoped, tag = 'scoped memory for tpu_custom_call.1']
    %10 = vsyncpa [#allocation5], 0
    %s11 = scalar_lea.sflag [#allocation5], 1
    %12 = vsyncpa %s11, 0
    %13 = vsyncpa [#allocation8], 0
    %s14 = scalar_lea.sflag [#allocation8], 1
    %15 = vsyncpa %s14, 0
    %16 = vsyncpa [#allocation6], 0
    %s17 = scalar_lea.sflag [#allocation6], 1
    %18 = vsyncpa %s17, 0
    %19 = vsyncpa [#allocation12], 0
    %s20 = scalar_lea.sflag [#allocation12], 1
    %21 = vsyncpa %s20, 0
    loop: start=0, step=1, limit=6
    $region2: #{tpu_custom_call.1} parent=1 // loop_pre_header
      _
    $region3: #{tpu_custom_call.1} parent=1 // loop_header
      %s23 = sphi 0, %s27
      %p24 = scmp.ge.s32.totalorder %s23, 6
      %s30 = sphi 0, %s42
      %s31 = sphi 0, %s38
      %s32 = sphi 0, %s30
      %s33 = sphi 0, %s31
      %s34 = sphi 0, %s32
      %s35 = sphi 0, %s33
      %s45 = sphi 0, %s47
      %s48 = sphi 0, %s45
      %s49 = sphi 0, %s48
      %s65 = sphi 0, %s49
      %s71 = sphi 0, %s73
      %s74 = sphi 0, %s71
      %s75 = sphi 0, %s74
      %s91 = sphi 0, %s75
      %s123 = sphi 0, %s125
      %s126 = sphi 0, %s123
      %s127 = sphi 0, %s126
      %s143 = sphi 0, %s127
      %s149 = sphi 0, %s151
      %s152 = sphi 0, %s149
      %s153 = sphi 0, %s152
      %s169 = sphi 0, %s153
      %s175 = sphi 0, %s177
      %s178 = sphi 0, %s175
      %s179 = sphi 0, %s178
      %s195 = sphi 0, %s179
    $region4: #{tpu_custom_call.1} parent=1 // loop_header_branch
      %26 = sbr.rel (%p24) target = $region8
    $region5: #{tpu_custom_call.1} parent=1 // loop_body
      %s28 = ssub.s32 %s23, 1
      %s29 = ssub.s32 %s23, 2
      %s36 = sadd.s32 1, %s31
      %p37 = scmp.ge.s32.totalorder %s36, 2
      %s38 = scalar_select %p37, 0, %s36
      %s39 = sadd.s32 1, %s30
      %s40 = scalar_select %p37, %s39, %s30
      %p41 = scmp.ge.s32.totalorder %s40, 2
      %s42 = scalar_select %p41, 0, %s40
      %s43 = ssub.s32 %s30, %s42
      %p44 = scmp.eq.s32.totalorder %s43, 0
      %s46 = sadd.s32 %s45, 1
      %s47 = scalar_select %p44, %s45, %s46
      %p50 = pneg %p44
      %p51 = scmp.eq.s32.totalorder %s23, 3
      %p52 = por %p50, %p51
      %p53 = scmp.ne.s32.totalorder %s45, %s48
      %p54 = scmp.eq.s32.totalorder %s23, 0
      %p55 = por %p53, %p54
      %p56 = scmp.ne.s32.totalorder %s45, %s48
      %p57 = scmp.eq.s32.totalorder %s28, 3
      %p58 = por %p56, %p57
      %p59 = scmp.ne.s32.totalorder %s48, %s49
      %p60 = scmp.eq.s32.totalorder %s28, 0
      %p61 = por %p59, %p60
      %p62 = scmp.ne.s32.totalorder %s48, %s49
      %p63 = scmp.eq.s32.totalorder %s29, 3
      %p64 = por %p62, %p63
      %p66 = scmp.ne.s32.totalorder %s49, %s65
      %p67 = scmp.eq.s32.totalorder %s29, 0
      %p68 = por %p66, %p67
      %s69 = ssub.s32 %s31, %s38
      %p70 = scmp.eq.s32.totalorder %s69, 0
      %s72 = sadd.s32 %s71, 1
      %s73 = scalar_select %p70, %s71, %s72
      %p76 = pneg %p70
      %p77 = scmp.eq.s32.totalorder %s23, 3
      %p78 = por %p76, %p77
      %p79 = scmp.ne.s32.totalorder %s71, %s74
      %p80 = scmp.eq.s32.totalorder %s23, 0
      %p81 = por %p79, %p80
      %p82 = scmp.ne.s32.totalorder %s71, %s74
      %p83 = scmp.eq.s32.totalorder %s28, 3
      %p84 = por %p82, %p83
      %p85 = scmp.ne.s32.totalorder %s74, %s75
      %p86 = scmp.eq.s32.totalorder %s28, 0
      %p87 = por %p85, %p86
      %p88 = scmp.ne.s32.totalorder %s74, %s75
      %p89 = scmp.eq.s32.totalorder %s29, 3
      %p90 = por %p88, %p89
      %p92 = scmp.ne.s32.totalorder %s75, %s91
      %p93 = scmp.eq.s32.totalorder %s29, 0
      %p94 = por %p92, %p93
      %s95 = sadd.s32 %s30, 1
      %p96 = scmp.lt.s32.totalorder %s95, 0
      %s97 = ssub.s32 0, %s95
      %s98 = scalar_select %p96, %s97, %s95
      %s99 = sand.u32 %s98, 1
      %s100 = ssub.s32 0, %s99
      %s101 = scalar_select %p96, %s100, %s99
      %p102 = scmp.ne.s32.totalorder %s101, 0
      %p103 = scmp.lt.s32.totalorder %s101, 0
      %p104 = pnand %p103, %p102
      %p105 = pneg %p104
      %s106 = sadd.s32 %s101, 2
      %s107 = scalar_select %p105, %s106, %s101
      %s108 = sadd.s32 %s42, 1
      %p109 = scmp.lt.s32.totalorder %s108, 0
      %s110 = ssub.s32 0, %s108
      %s111 = scalar_select %p109, %s110, %s108
      %s112 = sand.u32 %s111, 1
      %s113 = ssub.s32 0, %s112
      %s114 = scalar_select %p109, %s113, %s112
      %p115 = scmp.ne.s32.totalorder %s114, 0
      %p116 = scmp.lt.s32.totalorder %s114, 0
      %p117 = pnand %p116, %p115
      %p118 = pneg %p117
      %s119 = sadd.s32 %s114, 2
      %s120 = scalar_select %p118, %s119, %s114
      %s121 = ssub.s32 %s107, %s120
      %p122 = scmp.eq.s32.totalorder %s121, 0
      %s124 = sadd.s32 %s123, 1
      %s125 = scalar_select %p122, %s123, %s124
      %p128 = pneg %p122
      %p129 = scmp.eq.s32.totalorder %s23, 3
      %p130 = por %p128, %p129
      %p131 = scmp.ne.s32.totalorder %s123, %s126
      %p132 = scmp.eq.s32.totalorder %s23, 0
      %p133 = por %p131, %p132
      %p134 = scmp.ne.s32.totalorder %s123, %s126
      %p135 = scmp.eq.s32.totalorder %s28, 3
      %p136 = por %p134, %p135
      %p137 = scmp.ne.s32.totalorder %s126, %s127
      %p138 = scmp.eq.s32.totalorder %s28, 0
      %p139 = por %p137, %p138
      %p140 = scmp.ne.s32.totalorder %s126, %s127
      %p141 = scmp.eq.s32.totalorder %s29, 3
      %p142 = por %p140, %p141
      %p144 = scmp.ne.s32.totalorder %s127, %s143
      %p145 = scmp.eq.s32.totalorder %s29, 0
      %p146 = por %p144, %p145
      %s147 = ssub.s32 %s30, %s42
      %p148 = scmp.eq.s32.totalorder %s147, 0
      %s150 = sadd.s32 %s149, 1
      %s151 = scalar_select %p148, %s149, %s150
      %p154 = pneg %p148
      %p155 = scmp.eq.s32.totalorder %s23, 3
      %p156 = por %p154, %p155
      %p157 = scmp.ne.s32.totalorder %s149, %s152
      %p158 = scmp.eq.s32.totalorder %s23, 0
      %p159 = por %p157, %p158
      %p160 = scmp.ne.s32.totalorder %s149, %s152
      %p161 = scmp.eq.s32.totalorder %s28, 3
      %p162 = por %p160, %p161
      %p163 = scmp.ne.s32.totalorder %s152, %s153
      %p164 = scmp.eq.s32.totalorder %s28, 0
      %p165 = por %p163, %p164
      %p166 = scmp.ne.s32.totalorder %s152, %s153
      %p167 = scmp.eq.s32.totalorder %s29, 3
      %p168 = por %p166, %p167
      %p170 = scmp.ne.s32.totalorder %s153, %s169
      %p171 = scmp.eq.s32.totalorder %s29, 0
      %p172 = por %p170, %p171
      %s173 = ssub.s32 %s30, %s42
      %p174 = scmp.eq.s32.totalorder %s173, 0
      %s176 = sadd.s32 %s175, 1
      %s177 = scalar_select %p174, %s175, %s176
      %p180 = pneg %p174
      %p181 = scmp.eq.s32.totalorder %s23, 3
      %p182 = por %p180, %p181
      %p183 = scmp.ne.s32.totalorder %s175, %s178
      %p184 = scmp.eq.s32.totalorder %s23, 0
      %p185 = por %p183, %p184
      %p186 = scmp.ne.s32.totalorder %s175, %s178
      %p187 = scmp.eq.s32.totalorder %s28, 3
      %p188 = por %p186, %p187
      %p189 = scmp.ne.s32.totalorder %s178, %s179
      %p190 = scmp.eq.s32.totalorder %s28, 0
      %p191 = por %p189, %p190
      %p192 = scmp.ne.s32.totalorder %s178, %s179
      %p193 = scmp.eq.s32.totalorder %s29, 3
      %p194 = por %p192, %p193
      %p196 = scmp.ne.s32.totalorder %s179, %s195
      %p197 = scmp.eq.s32.totalorder %s29, 0
      %p198 = por %p196, %p197
      %p199 = scmp.le.s32.totalorder 1, %s23
      %p200 = scmp.lt.s32.totalorder %s23, 5
      %p201 = pnand %p199, %p200
      %p202 = pneg %p201
      // Predicated region
      $region9: #{tpu_custom_call.1} parent=5 // pred_check
        _
      $region10: #{tpu_custom_call.1} parent=5 // pred_check_branch
        %204 = sbr.rel (%p201) target = $region12
      $region11: #{tpu_custom_call.1} parent=5 // pred_region
        %s205 = ssub.s32 %s23, 1
      $region12: #{tpu_custom_call.1} parent=5 // pred_fallthru
        _
      %p206 = scmp.lt.s32.totalorder %s23, 4
      // Predicated region
      $region13: #{tpu_custom_call.1} parent=5 // pred_check
        %p207 = pneg %p206
      $region14: #{tpu_custom_call.1} parent=5 // pred_check_branch
        %209 = sbr.rel (%p207) target = $region16
      $region15: #{tpu_custom_call.1} parent=5 // pred_region
        // Predicated region
        $region17: #{tpu_custom_call.1} parent=15 // pred_check
          %p210 = pneg %p55
        $region18: #{tpu_custom_call.1} parent=15 // pred_check_branch
          %212 = sbr.rel (%p210) target = $region20
        $region19: #{tpu_custom_call.1} parent=15 // pred_region
          %s213 = sand.u32 %s45, 1
          %s214 = scalar_lea.sflag [#allocation5], %s213
          %s215 = sand.u32 %s45, 1
          %s216 = smul.addr %s215, 8
          %s217 = scalar_lea.vmem [#allocation4], %s216
          %s219 = ssub.s32 128, 128
          %220 = vsyncadd %s214, %s219
          %s221 = smul.addr %s30, 128
          %s222 = scalar_lea.hbm %s0, %s221
          %s224 = sshll.u32 %s217, 4
          %s225 = int_to_ptr.vmem [resolvable:$true] %s224
          %227 = dma.hbm_to_vmem [thread:$0]  %s222, 128, %s225, %s214
        $region20: #{tpu_custom_call.1} parent=15 // pred_fallthru
          _
        // Predicated region
        $region21: #{tpu_custom_call.1} parent=15 // pred_check
          %p228 = pneg %p81
        $region22: #{tpu_custom_call.1} parent=15 // pred_check_branch
          %230 = sbr.rel (%p228) target = $region24
        $region23: #{tpu_custom_call.1} parent=15 // pred_region
          %s231 = sand.u32 %s23, 1
          %s232 = scalar_lea.sflag [#allocation8], %s231
          %s233 = sand.u32 %s71, 1
          %s234 = smul.addr %s233, 8
          %s235 = scalar_lea.vmem [#allocation7], %s234
          %s237 = ssub.s32 128, 128
          %238 = vsyncadd %s232, %s237
          %s239 = smul.addr %s31, 128
          %s240 = scalar_lea.hbm %s1, %s239
          %s242 = sshll.u32 %s235, 4
          %s243 = int_to_ptr.vmem [resolvable:$true] %s242
          %245 = dma.hbm_to_vmem [thread:$0]  %s240, 128, %s243, %s232
        $region24: #{tpu_custom_call.1} parent=15 // pred_fallthru
          _
        // Predicated region
        $region25: #{tpu_custom_call.1} parent=15 // pred_check
          %p246 = pneg %p133
        $region26: #{tpu_custom_call.1} parent=15 // pred_check_branch
          %248 = sbr.rel (%p246) target = $region28
        $region27: #{tpu_custom_call.1} parent=15 // pred_region
          %s249 = sand.u32 %s23, 1
          %s250 = scalar_lea.sflag [#allocation8], %s249
          %s251 = sand.u32 %s123, 1
          %s252 = smul.addr %s251, 8
          %s253 = scalar_lea.vmem [#allocation9], %s252
          %s254 = sadd.s32 %s30, 1
          %p255 = scmp.lt.s32.totalorder %s254, 0
          %s256 = ssub.s32 0, %s254
          %s257 = scalar_select %p255, %s256, %s254
          %s258 = sand.u32 %s257, 1
          %s259 = ssub.s32 0, %s258
          %s260 = scalar_select %p255, %s259, %s258
          %p261 = scmp.ne.s32.totalorder %s260, 0
          %p262 = scmp.lt.s32.totalorder %s260, 0
          %p263 = pnand %p262, %p261
          %p264 = pneg %p263
          %s265 = sadd.s32 %s260, 2
          %s266 = scalar_select %p264, %s265, %s260
          %s268 = ssub.s32 128, 128
          %269 = vsyncadd %s250, %s268
          %s270 = smul.addr %s266, 128
          %s271 = scalar_lea.hbm %s2, %s270
          %s273 = sshll.u32 %s253, 4
          %s274 = int_to_ptr.vmem [resolvable:$true] %s273
          %276 = dma.hbm_to_vmem [thread:$0]  %s271, 128, %s274, %s250
        $region28: #{tpu_custom_call.1} parent=15 // pred_fallthru
          _
      $region16: #{tpu_custom_call.1} parent=5 // pred_fallthru
        _
      %p277 = scmp.le.s32.totalorder 1, %s23
      %p278 = scmp.lt.s32.totalorder %s23, 5
      %p279 = pnand %p277, %p278
      %p280 = pneg %p279
      // Predicated region
      $region29: #{tpu_custom_call.1} parent=5 // pred_check
        _
      $region30: #{tpu_custom_call.1} parent=5 // pred_check_branch
        %282 = sbr.rel (%p279) target = $region32
      $region31: #{tpu_custom_call.1} parent=5 // pred_region
        %s283 = ssub.s32 %s23, 1
        %s284 = sand.u32 %s48, 1
        %s285 = scalar_lea.sflag [#allocation5], %s284
        %s286 = sand.u32 %s48, 1
        %s287 = smul.addr %s286, 8
        %s288 = scalar_lea.vmem [#allocation4], %s287
        // Predicated region
        $region33: #{tpu_custom_call.1} parent=31 // pred_check
          %p289 = pneg %p61
        $region34: #{tpu_custom_call.1} parent=31 // pred_check_branch
          %291 = sbr.rel (%p289) target = $region36
        $region35: #{tpu_custom_call.1} parent=31 // pred_region
          %292 = dma.done %s285, 128
        $region36: #{tpu_custom_call.1} parent=31 // pred_fallthru
          _
        %s293 = sand.u32 %s28, 1
        %s294 = scalar_lea.sflag [#allocation8], %s293
        %s295 = sand.u32 %s74, 1
        %s296 = smul.addr %s295, 8
        %s297 = scalar_lea.vmem [#allocation7], %s296
        // Predicated region
        $region37: #{tpu_custom_call.1} parent=31 // pred_check
          %p298 = pneg %p87
        $region38: #{tpu_custom_call.1} parent=31 // pred_check_branch
          %300 = sbr.rel (%p298) target = $region40
        $region39: #{tpu_custom_call.1} parent=31 // pred_region
          %301 = dma.done %s294, 128
        $region40: #{tpu_custom_call.1} parent=31 // pred_fallthru
          _
        %s302 = sand.u32 %s28, 1
        %s303 = scalar_lea.sflag [#allocation8], %s302
        %s304 = sand.u32 %s126, 1
        %s305 = smul.addr %s304, 8
        %s306 = scalar_lea.vmem [#allocation9], %s305
        // Predicated region
        $region41: #{tpu_custom_call.1} parent=31 // pred_check
          %p307 = pneg %p139
        $region42: #{tpu_custom_call.1} parent=31 // pred_check_branch
          %309 = sbr.rel (%p307) target = $region44
        $region43: #{tpu_custom_call.1} parent=31 // pred_region
          %310 = dma.done %s303, 128
        $region44: #{tpu_custom_call.1} parent=31 // pred_fallthru
          _
        %s311 = sand.u32 %s48, 1
        %s312 = scalar_lea.sflag [#allocation5], %s311
        %s313 = sand.u32 %s48, 1
        %s314 = smul.addr %s313, 8
        %s315 = scalar_lea.vmem [#allocation4], %s314
        %p316 = pneg %p61
        %p317 = pneg %p58
        %s318 = sand.u32 %s28, 1
        %s319 = scalar_lea.sflag [#allocation8], %s318
        %s320 = sand.u32 %s74, 1
        %s321 = smul.addr %s320, 8
        %s322 = scalar_lea.vmem [#allocation7], %s321
        %p323 = pneg %p87
        %p324 = pneg %p84
        %s325 = sand.u32 %s28, 1
        %s326 = scalar_lea.sflag [#allocation8], %s325
        %s327 = sand.u32 %s126, 1
        %s328 = smul.addr %s327, 8
        %s329 = scalar_lea.vmem [#allocation9], %s328
        %p330 = pneg %p139
        %p331 = pneg %p136
        %p332 = pneg %p165
        %p333 = pneg %p162
        %s334 = sand.u32 %s152, 1
        %s335 = scalar_lea.sflag [#allocation6], %s334
        %s336 = sand.u32 %s152, 1
        %s337 = smul.addr %s336, 8
        %s338 = scalar_lea.vmem [#allocation10], %s337
        %p339 = pneg %p191
        %p340 = pneg %p188
        %s341 = sand.u32 %s178, 1
        %s342 = scalar_lea.sflag [#allocation12], %s341
        %s343 = sand.u32 %s178, 1
        %s344 = smul.addr %s343, 8
        %s345 = scalar_lea.vmem [#allocation11], %s344
        %s346 = sadd.s32 %s32, 1
        %p347 = scmp.lt.s32.totalorder %s346, 0
        %s348 = ssub.s32 0, %s346
        %s349 = scalar_select %p347, %s348, %s346
        %s350 = sand.u32 %s349, 1
        %s351 = ssub.s32 0, %s350
        %s352 = scalar_select %p347, %s351, %s350
        %p353 = scmp.ne.s32.totalorder %s352, 0
        %p354 = scmp.lt.s32.totalorder %s352, 0
        %p355 = pnand %p354, %p353
        %p356 = pneg %p355
        %s357 = sadd.s32 %s352, 2
        %s358 = scalar_select %p356, %s357, %s352
        %p359 = scmp.eq.s32.totalorder %s33, 0
        // Predicated region
        $region45: #{tpu_custom_call.1} parent=31 // pred_check
          %p360 = pneg %p359
        $region46: #{tpu_custom_call.1} parent=31 // pred_check_branch
          %362 = sbr.rel (%p360) target = $region48
        $region47: #{tpu_custom_call.1} parent=31 // pred_region
          %vm363 = vcmask 7168
          %364 = vst.msk [vmem:[#allocation2] sm:$0xff] %vm363, -1e+30
          %365 = vst.msk [vmem:[#allocation3] sm:$0xff] %vm363, 0.0
        $region48: #{tpu_custom_call.1} parent=31 // pred_fallthru
          _
        %v366 = vld [vmem:[%s288] sm:$0xff]
        %v367 = vld [vmem:[%s297] sm:$0xff]
        %vm368 = vcmask 261120
        %v370 = vsel %vm368, %v366, 0
        %v373 = vsel %vm368, %v367, 0
        %375 = vmatprep.subr.mxu0 0.0
        %376 = vmatpush1.xpose.msra.mxu0 %v373
        %377 = vmatprep.subr.mxu0 0.0
        %378 = vmatpush1.xpose.msra.mxu0 0.0
        %379 = vmatprep.subr.mxu0 0.0
        %380 = vmatpush1.xpose.msra.mxu0 0.0
        %381 = vmatprep.subr.mxu0 0.0
        %382 = vmatpush1.xpose.msra.mxu0 0.0
        %383 = vmatprep.subr.mxu0 0.0
        %384 = vmatpush1.xpose.msra.mxu0 0.0
        %385 = vmatprep.subr.mxu0 0.0
        %386 = vmatpush1.xpose.msra.mxu0 0.0
        %387 = vmatprep.subr.mxu0 0.0
        %388 = vmatpush1.xpose.msra.mxu0 0.0
        %389 = vmatprep.subr.mxu0 0.0
        %390 = vmatpush1.xpose.msra.mxu0 0.0
        %391 = vmatprep.subr.mxu0 0.0
        %392 = vmatpush1.xpose.msra.mxu0 0.0
        %393 = vmatprep.subr.mxu0 0.0
        %394 = vmatpush1.xpose.msra.mxu0 0.0
        %395 = vmatprep.subr.mxu0 0.0
        %396 = vmatpush1.xpose.msra.mxu0 0.0
        %397 = vmatprep.subr.mxu0 0.0
        %398 = vmatpush1.xpose.msra.mxu0 0.0
        %399 = vmatprep.subr.mxu0 0.0
        %400 = vmatpush1.xpose.msra.mxu0 0.0
        %401 = vmatprep.subr.mxu0 0.0
        %402 = vmatpush1.xpose.msra.mxu0 0.0
        %403 = vmatprep.subr.mxu0 0.0
        %404 = vmatpush1.xpose.msra.mxu0 0.0
        %405 = vmatprep.subr.mxu0 0.0
        %406 = vmatpush1.xpose.msra.mxu0 0.0
        %407 = vmatprep.subr.mxu0 0.0
        %408 = vmatpush1.xpose.msra.mxu0 0.0
        %409 = vmatprep.subr.mxu0 0.0
        %410 = vmatpush1.xpose.msra.mxu0 0.0
        %411 = vmatprep.subr.mxu0 0.0
        %412 = vmatpush1.xpose.msra.mxu0 0.0
        %413 = vmatprep.subr.mxu0 0.0
        %414 = vmatpush1.xpose.msra.mxu0 0.0
        %415 = vmatprep.subr.mxu0 0.0
        %416 = vmatpush1.xpose.msra.mxu0 0.0
        %417 = vmatprep.subr.mxu0 0.0
        %418 = vmatpush1.xpose.msra.mxu0 0.0
        %419 = vmatprep.subr.mxu0 0.0
        %420 = vmatpush1.xpose.msra.mxu0 0.0
        %421 = vmatprep.subr.mxu0 0.0
        %422 = vmatpush1.xpose.msra.mxu0 0.0
        %423 = vmatprep.subr.mxu0 0.0
        %424 = vmatpush1.xpose.msra.mxu0 0.0
        %425 = vmatprep.subr.mxu0 0.0
        %426 = vmatpush1.xpose.msra.mxu0 0.0
        %427 = vmatprep.subr.mxu0 0.0
        %428 = vmatpush1.xpose.msra.mxu0 0.0
        %429 = vmatprep.subr.mxu0 0.0
        %430 = vmatpush1.xpose.msra.mxu0 0.0
        %431 = vmatprep.subr.mxu0 0.0
        %432 = vmatpush1.xpose.msra.mxu0 0.0
        %433 = vmatprep.subr.mxu0 0.0
        %434 = vmatpush1.xpose.msra.mxu0 0.0
        %435 = vmatprep.subr.mxu0 0.0
        %436 = vmatpush1.xpose.msra.mxu0 0.0
        %437 = vmatprep.subr.mxu0 0.0
        %438 = vmatpush1.xpose.msra.mxu0 0.0
        %439 = vmatprep.mubr.f32.mxu0 0.0
        %440 = vmatmul.mubr.f32.gmra.mrb[0].mxu0 %v370
        %v441 = vpop.f32.mrb[0].mxu0
        %v442 = vadd.f32 0.0, %v441
        %v443 = vpop.f32.mrb[0].mxu0
        %444 = vdwg.mxu0
        %v445 = vmul.f32 %v442, 5.0
        %s446 = smul.u32 %s32, 8
        %s447 = smul.u32 %s33, 8
        %s448 = sadd.s32 %s447, 8
        %p449 = scmp.lt.s32.totalorder %s446, %s448
        %s450 = sadd.s32 %s446, 8
        %p451 = scmp.lt.s32.totalorder %s447, %s450
        %p452 = pnand %p449, %p451
        %p453 = pneg %p452
        // Predicated region
        $region49: #{tpu_custom_call.1} parent=31 // pred_check
          _
        $region50: #{tpu_custom_call.1} parent=31 // pred_check_branch
          %455 = sbr.rel (%p452) target = $region52
        $region51: #{tpu_custom_call.1} parent=31 // pred_region
          %v456 = vlaneseq
          %v457 = vshrl.u32 %v456, 7
          %v458 = vstv %s446
          %v459 = vadd.s32 %v458, %v457
          %v460 = vlaneseq
          %v461 = vand.u32 %v460, 127
          %v462 = vstv %s447
          %v463 = vadd.s32 %v462, %v461
          %vm464 = vcmp.eq.s32.totalorder %v459, %v463
          %v465 = vsel %vm464, -1e+30, %v445
          %v466 = vld [vmem:[#allocation2] sm:$0xff]
          %vm467 = vcmask 64512
          %v468 = vsel %vm467, %v465, -inf
          %469 = vmax.xlane.f32.xlu0 %v468
          %v470 = vpop.xlane.xlu0 %469
          %v471 = vmax.f32 %v466, %v470
          %v472 = vld [vmem:[#allocation3] sm:$0xff]
          %v473 = vsub.f32 %v466, %v471
          %v474 = vmul.f32 %v473, 1.442695
          %v475 = vpow.pop %v474
          %v476 = vmul.f32 %v472, %v475
          %478 = vset.pattern.permute.xlu0 0
          %479 = vperm.xlu0 %478, %v471
          %v480 = vpop.permute.xlu0 %479
          %v482 = vsub.f32 %v465, %v480
          %v483 = vmul.f32 %v482, 1.442695
          %v484 = vpow.pop %v483
          %v485 = vsel %vm467, %v484, 0.0
          %486 = vadd.xlane.f32.xlu0 %v485
          %v487 = vpop.xlane.xlu0 %486
          %v488 = vadd.f32 %v476, %v487
          %vm489 = vcmask 7168
          %490 = vst.msk [vmem:[#allocation3] sm:$0xff] %vm489, %v488
          %491 = vst.msk [vmem:[#allocation2] sm:$0xff] %vm489, %v471
        $region52: #{tpu_custom_call.1} parent=31 // pred_fallthru
          _
        %p492 = pneg %p453
        // Predicated region
        $region53: #{tpu_custom_call.1} parent=31 // pred_check
          _
        $region54: #{tpu_custom_call.1} parent=31 // pred_check_branch
          %494 = sbr.rel (%p453) target = $region56
        $region55: #{tpu_custom_call.1} parent=31 // pred_region
          %v495 = vld [vmem:[#allocation2] sm:$0xff]
          %vm496 = vcmask 64512
          %v497 = vsel %vm496, %v445, -inf
          %498 = vmax.xlane.f32.xlu0 %v497
          %v499 = vpop.xlane.xlu0 %498
          %v500 = vmax.f32 %v495, %v499
          %v501 = vld [vmem:[#allocation3] sm:$0xff]
          %v502 = vsub.f32 %v495, %v500
          %v503 = vmul.f32 %v502, 1.442695
          %v504 = vpow.pop %v503
          %v505 = vmul.f32 %v501, %v504
          %507 = vset.pattern.permute.xlu0 0
          %508 = vperm.xlu0 %507, %v500
          %v509 = vpop.permute.xlu0 %508
          %v511 = vsub.f32 %v445, %v509
          %v512 = vmul.f32 %v511, 1.442695
          %v513 = vpow.pop %v512
          %v514 = vsel %vm496, %v513, 0.0
          %515 = vadd.xlane.f32.xlu0 %v514
          %v516 = vpop.xlane.xlu0 %515
          %v517 = vadd.f32 %v505, %v516
          %vm518 = vcmask 7168
          %519 = vst.msk [vmem:[#allocation3] sm:$0xff] %vm518, %v517
          %520 = vst.msk [vmem:[#allocation2] sm:$0xff] %vm518, %v500
        $region56: #{tpu_custom_call.1} parent=31 // pred_fallthru
          _
        %p521 = scmp.eq.s32.totalorder %s33, 1
        // Predicated region
        $region57: #{tpu_custom_call.1} parent=31 // pred_check
          %p522 = pneg %p521
        $region58: #{tpu_custom_call.1} parent=31 // pred_check_branch
          %524 = sbr.rel (%p522) target = $region60
        $region59: #{tpu_custom_call.1} parent=31 // pred_region
          %v525 = vld [vmem:[#allocation2] sm:$0xff]
          %v526 = vld [vmem:[#allocation3] sm:$0xff]
          %v527 = vlog2.pop %v526
          %v528 = vmul.f32 %v527, 0.6931472
          %v529 = vadd.f32 %v525, %v528
          %v530 = vld [vmem:[%s306] sm:$0xff]
          %v531 = vmul.f32 %v366, %v530
          %v532 = vsel %vm368, %v531, 0.0
          %533 = vadd.xlane.f32.xlu0 %v532
          %v534 = vpop.xlane.xlu0 %533
          %v535 = vmul.f32 %v534, 5.0
          %v536 = vsub.f32 %v529, %v535
          %vm537 = vcmask 7168
          %v538 = vsel %vm537, %v536, 0.0
          %539 = vadd.xlane.f32.xlu0 %v538
          %v540 = vpop.xlane.xlu0 %539
          %v541 = vrot.slane %v540, 4
          %v542 = vadd.f32 %v540, %v541
          %v543 = vrot.slane %v542, 2
          %v544 = vadd.f32 %v542, %v543
          %v545 = vrot.slane %v544, 1
          %v546 = vadd.f32 %v544, %v545
          %s547 = vtos %v546
          %v548 = vsub.f32 %v535, %v529
          %v549 = vmul.f32 %v548, 1.442695
          %v550 = vpow.pop %v549
          %v551 = vsel %vm537, %v550, 0.0
          %552 = vadd.xlane.f32.xlu0 %v551
          %v553 = vpop.xlane.xlu0 %552
          %v554 = vrot.slane %v553, 4
          %v555 = vadd.f32 %v553, %v554
          %v556 = vrot.slane %v555, 2
          %v557 = vadd.f32 %v555, %v556
          %v558 = vrot.slane %v557, 1
          %v559 = vadd.f32 %v557, %v558
          %s560 = vtos %v559
          %v561 = vstv %s547
          %562 = vst [vmem:[%s338] sm:$0xff] %v561
          %v563 = vstv %s560
          %564 = vst [vmem:[%s345] sm:$0xff] %v563
        $region60: #{tpu_custom_call.1} parent=31 // pred_fallthru
          _
        %s565 = sand.u32 %s152, 1
        %s566 = scalar_lea.sflag [#allocation6], %s565
        %s567 = sand.u32 %s152, 1
        %s568 = smul.addr %s567, 8
        %s569 = scalar_lea.vmem [#allocation10], %s568
        %s570 = sand.u32 %s178, 1
        %s571 = scalar_lea.sflag [#allocation12], %s570
        %s572 = sand.u32 %s178, 1
        %s573 = smul.addr %s572, 8
        %s574 = scalar_lea.vmem [#allocation11], %s573
        // Predicated region
        $region61: #{tpu_custom_call.1} parent=31 // pred_check
          %p575 = pneg %p162
        $region62: #{tpu_custom_call.1} parent=31 // pred_check_branch
          %577 = sbr.rel (%p575) target = $region64
        $region63: #{tpu_custom_call.1} parent=31 // pred_region
          %s579 = ssub.s32 128, 128
          %580 = vsyncadd %s566, %s579
          %s581 = smul.addr %s32, 128
          %s582 = scalar_lea.hbm %s3, %s581
          %s584 = sshll.u32 %s569, 4
          %s585 = int_to_ptr.vmem [resolvable:$true] %s584
          %587 = dma.vmem_to_hbm [thread:$0]  %s585, 128, %s582, %s566
        $region64: #{tpu_custom_call.1} parent=31 // pred_fallthru
          _
        // Predicated region
        $region65: #{tpu_custom_call.1} parent=31 // pred_check
          %p588 = pneg %p188
        $region66: #{tpu_custom_call.1} parent=31 // pred_check_branch
          %590 = sbr.rel (%p588) target = $region68
        $region67: #{tpu_custom_call.1} parent=31 // pred_region
          %s592 = ssub.s32 128, 128
          %593 = vsyncadd %s571, %s592
          %s594 = smul.addr %s32, 128
          %s595 = scalar_lea.hbm %s4, %s594
          %s597 = sshll.u32 %s574, 4
          %s598 = int_to_ptr.vmem [resolvable:$true] %s597
          %600 = dma.vmem_to_hbm [thread:$0]  %s598, 128, %s595, %s571
        $region68: #{tpu_custom_call.1} parent=31 // pred_fallthru
          _
      $region32: #{tpu_custom_call.1} parent=5 // pred_fallthru
        _
      %p601 = scmp.le.s32.totalorder 2, %s23
      // Predicated region
      $region69: #{tpu_custom_call.1} parent=5 // pred_check
        %p602 = pneg %p601
      $region70: #{tpu_custom_call.1} parent=5 // pred_check_branch
        %604 = sbr.rel (%p602) target = $region72
      $region71: #{tpu_custom_call.1} parent=5 // pred_region
        %s605 = ssub.s32 %s23, 2
        // Predicated region
        $region73: #{tpu_custom_call.1} parent=71 // pred_check
          %p606 = pneg %p168
        $region74: #{tpu_custom_call.1} parent=71 // pred_check_branch
          %608 = sbr.rel (%p606) target = $region76
        $region75: #{tpu_custom_call.1} parent=71 // pred_region
          %s609 = sand.u32 %s153, 1
          %s610 = scalar_lea.sflag [#allocation6], %s609
          %s611 = sand.u32 %s153, 1
          %s612 = smul.addr %s611, 8
          %s613 = scalar_lea.vmem [#allocation10], %s612
          %614 = dma.done %s610, 128
        $region76: #{tpu_custom_call.1} parent=71 // pred_fallthru
          _
        // Predicated region
        $region77: #{tpu_custom_call.1} parent=71 // pred_check
          %p615 = pneg %p194
        $region78: #{tpu_custom_call.1} parent=71 // pred_check_branch
          %617 = sbr.rel (%p615) target = $region80
        $region79: #{tpu_custom_call.1} parent=71 // pred_region
          %s618 = sand.u32 %s179, 1
          %s619 = scalar_lea.sflag [#allocation12], %s618
          %s620 = sand.u32 %s179, 1
          %s621 = smul.addr %s620, 8
          %s622 = scalar_lea.vmem [#allocation11], %s621
          %623 = dma.done %s619, 128
        $region80: #{tpu_custom_call.1} parent=71 // pred_fallthru
          _
      $region72: #{tpu_custom_call.1} parent=5 // pred_fallthru
        _
    $region6: #{tpu_custom_call.1} parent=1 // loop_footer
      %s27 = sadd.s32 1, %s23
    $region7: #{tpu_custom_call.1} parent=1 // loop_footer_branch
      %22 = sbr.rel target = $region3
    $region8: #{tpu_custom_call.1} parent=1 // loop_exit
      _
    %624 = vsyncpa [#allocation5], 1
    %s625 = scalar_lea.sflag [#allocation5], 1
    %626 = vsyncpa %s625, 1
    %627 = vsyncpa [#allocation8], 1
    %s628 = scalar_lea.sflag [#allocation8], 1
    %629 = vsyncpa %s628, 1
    %630 = vsyncpa [#allocation6], 1
    %s631 = scalar_lea.sflag [#allocation6], 1
    %632 = vsyncpa %s631, 1
    %633 = vsyncpa [#allocation12], 1
    %s634 = scalar_lea.sflag [#allocation12], 1
    %635 = vsyncpa %s634, 1

</llo_original>
